<compile_context>
chip_gen: v7x
topology: tpu7x:2x2x1
jax: 0.10.0
libtpu: 0.0.40
codegen_flags: <defaults>
</compile_context>

<pallas_src>
import math
import functools

import jax
import jax.numpy as jnp
from jax.experimental import pallas as pl
from jax.experimental.pallas import tpu as pltpu

BN_EPS = 1e-5
LANE = 128      # TPU lane width


def _round_up(x, m):
    return (x + m - 1) // m * m


def _device_kind():
    try:
        return jax.devices()[0].device_kind.lower()
    except Exception:
        return ""


def _bf16_elementwise_default():
    # v6e / v7x have bf16-capable VPUs; v5e and older do not.
    kind = _device_kind()
    return ("v6" in kind) or ("v7" in kind)


def _max_tile_b():
    # v5e MXU is 128x128, so 256-row tiles add no MXU efficiency, only
    # vreg/VMEM pressure; v6e / v7x MXUs are 256 wide.
    kind = _device_kind()
    if ("v6" in kind) or ("v7" in kind):
        return 256
    return 128


def _pick_tile_b(b, max_tile):
    """Adaptive batch tile: small batches get one small tile; larger batches
    get >=2 grid steps (so "parallel" can use both v7x TensorCores)."""
    b = max(b, 1)
    if b <= 16:
        return _round_up(b, 8)
    half = (b + 1) // 2
    return max(16, min(max_tile, _round_up(half, 16)))


def _make_kernel(n_hidden, bf16_elementwise):
    """Kernel for `n_hidden` folded (Linear+BN)->ReLU blocks + linear head.

    Emits raw f32 logits on a lane-dense [tile_b, 128] slab (column 0 real)."""

    def kernel(*refs):
        # refs: [x] + n_hidden*[W, b] + [W_out, b_out] + [out]
        x_ref = refs[0]
        idx = 1
        h = x_ref[...].astype(jnp.bfloat16)                   # f32 in VMEM -> bf16 MXU

        for _ in range(n_hidden):
            w_ref, b_ref = refs[idx], refs[idx + 1]
            idx += 2
            y = jnp.dot(h, w_ref[...], preferred_element_type=jnp.float32)  # MXU, f32 acc
            if bf16_elementwise:
                # bf16 bias + ReLU (v6e/v7x VPU): halves elementwise vreg bytes.
                yb = y.astype(jnp.bfloat16) + b_ref[...].astype(jnp.bfloat16)
                h = jnp.maximum(yb, 0.0)
            else:
                # f32 bias + ReLU (v5e has no bf16 VALU).
                h = jnp.maximum(y + b_ref[...], 0.0).astype(jnp.bfloat16)

        w_out_ref, b_out_ref, out_ref = refs[idx], refs[idx + 1], refs[idx + 2]
        logits = jnp.dot(h, w_out_ref[...], preferred_element_type=jnp.float32)
        out_ref[...] = (logits + b_out_ref[...]).astype(out_ref.dtype)  # lane-dense store

    return kernel


def init_params(key, input_size, hidden_sizes):
    """PyTorch-style params: kaiming_uniform_(relu) Linear weights [out, in],
    zero biases, BN gamma=1 / beta=0 / running_mean=0 / running_var=1."""
    hidden = []
    prev = input_size
    for h in hidden_sizes:
        key, wk = jax.random.split(key)
        bound = math.sqrt(6.0 / prev)  # kaiming_uniform, gain=sqrt(2), fan_in
        w = jax.random.uniform(wk, (h, prev), jnp.float32, -bound, bound)
        hidden.append(dict(
            w=w,
            b=jnp.zeros((h,), jnp.float32),
            gamma=jnp.ones((h,), jnp.float32),
            beta=jnp.zeros((h,), jnp.float32),
            run_mean=jnp.zeros((h,), jnp.float32),
            run_var=jnp.ones((h,), jnp.float32),
        ))
        prev = h
    key, wk = jax.random.split(key)
    bound = math.sqrt(6.0 / prev)
    w_out = jax.random.uniform(wk, (1, prev), jnp.float32, -bound, bound)
    b_out = jnp.zeros((1,), jnp.float32)
    return hidden, (w_out, b_out)


def prepare_params(hidden_params, head_params, input_size):
    """Fold eval-mode BN into each Linear, transpose to [in, out], zero-pad the
    in/out dims to multiples of 128 lanes, cast weights to bf16 (biases f32)."""
    flat = []
    prev = input_size
    prev_pad = _round_up(input_size, LANE)
    for p in hidden_params:
        h = p["w"].shape[0]
        scale = p["gamma"] * jax.lax.rsqrt(p["run_var"] + BN_EPS)      # [h]
        w_fold = p["w"] * scale[:, None]                               # [h, in]
        b_fold = (p["b"] - p["run_mean"]) * scale + p["beta"]          # [h]
        h_pad = _round_up(h, LANE)
        w_t = jnp.zeros((prev_pad, h_pad), jnp.float32).at[:prev, :h].set(w_fold.T)
        b_p = jnp.zeros((1, h_pad), jnp.float32).at[0, :h].set(b_fold)
        flat.extend([w_t.astype(jnp.bfloat16), b_p])
        prev, prev_pad = h, h_pad
    w_out, b_out = head_params
    w_t = jnp.zeros((prev_pad, LANE), jnp.float32).at[:prev, :1].set(w_out.T)
    b_p = jnp.zeros((1, LANE), jnp.float32).at[0, :1].set(b_out)
    flat.extend([w_t.astype(jnp.bfloat16), b_p])
    return flat


@functools.partial(jax.jit, static_argnames=("n_hidden", "input_size", "tile_b",
                                             "bf16_elementwise"))
def _saplma_forward_impl(x, flat_params, *, n_hidden, input_size, tile_b,
                         bf16_elementwise):
    b = x.shape[0]
    f_pad = _round_up(input_size, LANE)
    b_pad = _round_up(max(b, 1), tile_b)

    x = x.astype(jnp.float32)
    if b_pad != b or f_pad != input_size:
        xp = jnp.pad(x, ((0, b_pad - b), (0, f_pad - input_size)))
    else:
        xp = x                              # already aligned: no wrapper copy

    kernel = _make_kernel(n_hidden, bf16_elementwise)
    grid = (b_pad // tile_b,)

    in_specs = [pl.BlockSpec((tile_b, f_pad), lambda i: (i, 0))]
    for p in flat_params:
        # full-array block, constant block index -> stays VMEM-resident.
        # (pl.Buffered(1) would drop the redundant second buffer, but with
        #  <1 MB of params it is pure future-proofing; skipped for safety.)
        in_specs.append(pl.BlockSpec(p.shape, lambda i: (0, 0)))
    out_spec = pl.BlockSpec((tile_b, LANE), lambda i: (i, 0))

    # Advisory cost estimate for XLA scheduling (no transcendentals in-kernel).
    widths = [f_pad] + [flat_params[2 * l].shape[1] for l in range(n_hidden)] + [LANE]
    flops = 2 * b_pad * sum(widths[i] * widths[i + 1] for i in range(len(widths) - 1))
    param_bytes = sum(int(p.size) * p.dtype.itemsize for p in flat_params)
    bytes_accessed = int(xp.size) * 4 + param_bytes + b_pad * LANE * 4
    cost = pl.CostEstimate(flops=flops, transcendentals=0,
                           bytes_accessed=bytes_accessed)

    logits = pl.pallas_call(
        kernel,
        out_shape=jax.ShapeDtypeStruct((b_pad, LANE), jnp.float32),
        grid=grid,
        in_specs=in_specs,
        out_specs=out_spec,
        compiler_params=pltpu.CompilerParams(
            dimension_semantics=("parallel",),
            vmem_limit_bytes=32 * 1024 * 1024),
        cost_estimate=cost,
    )(xp, *flat_params)

    # Sigmoid only on the single meaningful column; fuses with the slice.
    return jax.nn.sigmoid(logits[:b, :1])


def saplma_forward(x, flat_params, *, n_hidden, input_size):
    tile_b = _pick_tile_b(x.shape[0], _max_tile_b())
    return _saplma_forward_impl(
        x, flat_params, n_hidden=n_hidden, input_size=input_size,
        tile_b=tile_b, bf16_elementwise=_bf16_elementwise_default())


def reference_forward(x, hidden_params, head_params):
    """Pure-JAX eval-mode reference (f32) for correctness checking."""
    h = x
    for p in hidden_params:
        y = h @ p["w"].T + p["b"]
        y = (y - p["run_mean"]) * (p["gamma"] / jnp.sqrt(p["run_var"] + BN_EPS)) + p["beta"]
        h = jnp.maximum(y, 0.0)
    w_out, b_out = head_params
    return jax.nn.sigmoid(h @ w_out.T + b_out)


if __name__ == "__main__":
    # Small shapes consistent with the module: x is [batch, input_size].
    batch = 8
    input_size = 128
    hidden_sizes = [64, 32, 16]

    key = jax.random.PRNGKey(0)
    xkey, pkey = jax.random.split(key)
    x = jax.random.normal(xkey, (batch, input_size), jnp.float32)

    hidden_params, head_params = init_params(pkey, input_size, hidden_sizes)
    flat_params = prepare_params(hidden_params, head_params, input_size)

    out = saplma_forward(x, flat_params,
                         n_hidden=len(hidden_sizes), input_size=input_size)
    out = jax.block_until_ready(out)

    ref = reference_forward(x, hidden_params, head_params)

    assert out.shape == (batch, 1)
    assert bool(jnp.all((out >= 0.0) & (out <= 1.0)))
    # bf16 MXU path vs f32 reference: loose-but-meaningful tolerance.
    assert bool(jnp.max(jnp.abs(out - ref)) < 3e-2), jnp.max(jnp.abs(out - ref))
    print("KERNEL_OK")
</pallas_src>

<mosaic_0001>
module attributes {stable_mosaic.version = 11 : i64} {
  func.func @kernel(%arg0: i32, %arg1: memref<8x128xf32, #tpu.memory_space<vmem>>, %arg2: memref<128x128xbf16, #tpu.memory_space<vmem>>, %arg3: memref<1x128xf32, #tpu.memory_space<vmem>>, %arg4: memref<128x128xbf16, #tpu.memory_space<vmem>>, %arg5: memref<1x128xf32, #tpu.memory_space<vmem>>, %arg6: memref<128x128xbf16, #tpu.memory_space<vmem>>, %arg7: memref<1x128xf32, #tpu.memory_space<vmem>>, %arg8: memref<128x128xbf16, #tpu.memory_space<vmem>>, %arg9: memref<1x128xf32, #tpu.memory_space<vmem>>, %arg10: memref<8x128xf32, #tpu.memory_space<vmem>>) attributes {dimension_semantics = [#tpu.dimension_semantics<parallel>], iteration_bounds = array<i64: 1>, scalar_prefetch = 0 : i64, scratch_operands = 0 : i64, tpu.core_type = #tpu.core_type<tc>, window_params = [{transform_indices = @transform_0, window_bounds = array<i64: 8, 128>}, {pipeline_mode = #tpu.pipeline_mode<synchronous>, transform_indices = @transform_1, window_bounds = array<i64: 128, 128>}, {pipeline_mode = #tpu.pipeline_mode<synchronous>, transform_indices = @transform_2, window_bounds = array<i64: 1, 128>}, {pipeline_mode = #tpu.pipeline_mode<synchronous>, transform_indices = @transform_3, window_bounds = array<i64: 128, 128>}, {pipeline_mode = #tpu.pipeline_mode<synchronous>, transform_indices = @transform_4, window_bounds = array<i64: 1, 128>}, {pipeline_mode = #tpu.pipeline_mode<synchronous>, transform_indices = @transform_5, window_bounds = array<i64: 128, 128>}, {pipeline_mode = #tpu.pipeline_mode<synchronous>, transform_indices = @transform_6, window_bounds = array<i64: 1, 128>}, {pipeline_mode = #tpu.pipeline_mode<synchronous>, transform_indices = @transform_7, window_bounds = array<i64: 128, 128>}, {pipeline_mode = #tpu.pipeline_mode<synchronous>, transform_indices = @transform_8, window_bounds = array<i64: 1, 128>}, {transform_indices = @transform_9, window_bounds = array<i64: 8, 128>}]} {
    %c0 = arith.constant 0 : index
    %c0_0 = arith.constant 0 : index
    %0 = vector.load %arg1[%c0, %c0_0] : memref<8x128xf32, #tpu.memory_space<vmem>>, vector<8x128xf32>
    %1 = arith.truncf %0 : vector<8x128xf32> to vector<8x128xbf16>
    %c0_1 = arith.constant 0 : index
    %c0_2 = arith.constant 0 : index
    %2 = vector.load %arg2[%c0_1, %c0_2] : memref<128x128xbf16, #tpu.memory_space<vmem>>, vector<128x128xbf16>
    %cst = arith.constant dense<0.000000e+00> : vector<8x128xf32>
    %3 = tpu.matmul %1, %2, %cst {dimension_numbers = #tpu.dot_dimension_numbers<[1], [0], [0], [1], [0, 0, 1, 1], [], []>} : vector<8x128xbf16>, vector<128x128xbf16>, vector<8x128xf32> -> vector<8x128xf32>
    %c0_3 = arith.constant 0 : index
    %c0_4 = arith.constant 0 : index
    %4 = vector.load %arg3[%c0_3, %c0_4] : memref<1x128xf32, #tpu.memory_space<vmem>>, vector<1x128xf32>
    %5 = vector.broadcast %4 : vector<1x128xf32> to vector<8x128xf32>
    %6 = arith.addf %3, %5 : vector<8x128xf32>
    %cst_5 = arith.constant 0.000000e+00 : f32
    %7 = vector.broadcast %cst_5 : f32 to vector<8x128xf32>
    %8 = arith.maximumf %6, %7 : vector<8x128xf32>
    %9 = arith.truncf %8 : vector<8x128xf32> to vector<8x128xbf16>
    %c0_6 = arith.constant 0 : index
    %c0_7 = arith.constant 0 : index
    %10 = vector.load %arg4[%c0_6, %c0_7] : memref<128x128xbf16, #tpu.memory_space<vmem>>, vector<128x128xbf16>
    %cst_8 = arith.constant dense<0.000000e+00> : vector<8x128xf32>
    %11 = tpu.matmul %9, %10, %cst_8 {dimension_numbers = #tpu.dot_dimension_numbers<[1], [0], [0], [1], [0, 0, 1, 1], [], []>} : vector<8x128xbf16>, vector<128x128xbf16>, vector<8x128xf32> -> vector<8x128xf32>
    %c0_9 = arith.constant 0 : index
    %c0_10 = arith.constant 0 : index
    %12 = vector.load %arg5[%c0_9, %c0_10] : memref<1x128xf32, #tpu.memory_space<vmem>>, vector<1x128xf32>
    %13 = vector.broadcast %12 : vector<1x128xf32> to vector<8x128xf32>
    %14 = arith.addf %11, %13 : vector<8x128xf32>
    %cst_11 = arith.constant 0.000000e+00 : f32
    %15 = vector.broadcast %cst_11 : f32 to vector<8x128xf32>
    %16 = arith.maximumf %14, %15 : vector<8x128xf32>
    %17 = arith.truncf %16 : vector<8x128xf32> to vector<8x128xbf16>
    %c0_12 = arith.constant 0 : index
    %c0_13 = arith.constant 0 : index
    %18 = vector.load %arg6[%c0_12, %c0_13] : memref<128x128xbf16, #tpu.memory_space<vmem>>, vector<128x128xbf16>
    %cst_14 = arith.constant dense<0.000000e+00> : vector<8x128xf32>
    %19 = tpu.matmul %17, %18, %cst_14 {dimension_numbers = #tpu.dot_dimension_numbers<[1], [0], [0], [1], [0, 0, 1, 1], [], []>} : vector<8x128xbf16>, vector<128x128xbf16>, vector<8x128xf32> -> vector<8x128xf32>
    %c0_15 = arith.constant 0 : index
    %c0_16 = arith.constant 0 : index
    %20 = vector.load %arg7[%c0_15, %c0_16] : memref<1x128xf32, #tpu.memory_space<vmem>>, vector<1x128xf32>
    %21 = vector.broadcast %20 : vector<1x128xf32> to vector<8x128xf32>
    %22 = arith.addf %19, %21 : vector<8x128xf32>
    %cst_17 = arith.constant 0.000000e+00 : f32
    %23 = vector.broadcast %cst_17 : f32 to vector<8x128xf32>
    %24 = arith.maximumf %22, %23 : vector<8x128xf32>
    %25 = arith.truncf %24 : vector<8x128xf32> to vector<8x128xbf16>
    %c0_18 = arith.constant 0 : index
    %c0_19 = arith.constant 0 : index
    %26 = vector.load %arg8[%c0_18, %c0_19] : memref<128x128xbf16, #tpu.memory_space<vmem>>, vector<128x128xbf16>
    %cst_20 = arith.constant dense<0.000000e+00> : vector<8x128xf32>
    %27 = tpu.matmul %25, %26, %cst_20 {dimension_numbers = #tpu.dot_dimension_numbers<[1], [0], [0], [1], [0, 0, 1, 1], [], []>} : vector<8x128xbf16>, vector<128x128xbf16>, vector<8x128xf32> -> vector<8x128xf32>
    %c0_21 = arith.constant 0 : index
    %c0_22 = arith.constant 0 : index
    %28 = vector.load %arg9[%c0_21, %c0_22] : memref<1x128xf32, #tpu.memory_space<vmem>>, vector<1x128xf32>
    %29 = vector.broadcast %28 : vector<1x128xf32> to vector<8x128xf32>
    %30 = arith.addf %27, %29 : vector<8x128xf32>
    %c0_23 = arith.constant 0 : index
    %c0_24 = arith.constant 0 : index
    %31 = vector.load %arg10[%c0_23, %c0_24] : memref<8x128xf32, #tpu.memory_space<vmem>>, vector<8x128xf32>
    tpu.vector_store %arg10[%c0_23, %c0_24], %30 {strides = array<i32>} : memref<8x128xf32, #tpu.memory_space<vmem>>, vector<8x128xf32>,
    return
  }
  func.func @transform_0(%arg0: i32) -> (i32, i32) {
    %c0_i32 = arith.constant 0 : i32
    %c0_i32_0 = arith.constant 0 : i32
    return %arg0, %c0_i32 : i32, i32
  }
  func.func @transform_1(%arg0: i32) -> (i32, i32) {
    %c0_i32 = arith.constant 0 : i32
    %c0_i32_0 = arith.constant 0 : i32
    %c0_i32_1 = arith.constant 0 : i32
    return %c0_i32, %c0_i32_0 : i32, i32
  }
  func.func @transform_2(%arg0: i32) -> (i32, i32) {
    %c0_i32 = arith.constant 0 : i32
    %c0_i32_0 = arith.constant 0 : i32
    %c0_i32_1 = arith.constant 0 : i32
    return %c0_i32, %c0_i32_0 : i32, i32
  }
  func.func @transform_3(%arg0: i32) -> (i32, i32) {
    %c0_i32 = arith.constant 0 : i32
    %c0_i32_0 = arith.constant 0 : i32
    %c0_i32_1 = arith.constant 0 : i32
    return %c0_i32, %c0_i32_0 : i32, i32
  }
  func.func @transform_4(%arg0: i32) -> (i32, i32) {
    %c0_i32 = arith.constant 0 : i32
    %c0_i32_0 = arith.constant 0 : i32
    %c0_i32_1 = arith.constant 0 : i32
    return %c0_i32, %c0_i32_0 : i32, i32
  }
  func.func @transform_5(%arg0: i32) -> (i32, i32) {
    %c0_i32 = arith.constant 0 : i32
    %c0_i32_0 = arith.constant 0 : i32
    %c0_i32_1 = arith.constant 0 : i32
    return %c0_i32, %c0_i32_0 : i32, i32
  }
  func.func @transform_6(%arg0: i32) -> (i32, i32) {
    %c0_i32 = arith.constant 0 : i32
    %c0_i32_0 = arith.constant 0 : i32
    %c0_i32_1 = arith.constant 0 : i32
    return %c0_i32, %c0_i32_0 : i32, i32
  }
  func.func @transform_7(%arg0: i32) -> (i32, i32) {
    %c0_i32 = arith.constant 0 : i32
    %c0_i32_0 = arith.constant 0 : i32
    %c0_i32_1 = arith.constant 0 : i32
    return %c0_i32, %c0_i32_0 : i32, i32
  }
  func.func @transform_8(%arg0: i32) -> (i32, i32) {
    %c0_i32 = arith.constant 0 : i32
    %c0_i32_0 = arith.constant 0 : i32
    %c0_i32_1 = arith.constant 0 : i32
    return %c0_i32, %c0_i32_0 : i32, i32
  }
  func.func @transform_9(%arg0: i32) -> (i32, i32) {
    %c0_i32 = arith.constant 0 : i32
    %c0_i32_0 = arith.constant 0 : i32
    return %arg0, %c0_i32 : i32, i32
  }
}

</mosaic_0001>

<llo_original>
// kernel: _saplma_forward_impl.1
$region0: #{_saplma_forward_impl.1}
  #allocation0 [shape = 'u32[]', space=smem, size = 0x4, offset = 0x4, fixed_abs, tag = 'smem constant byte address 0x4 - core index']
  #allocation1 [shape = 'u32[144,128]{1,0:T(1,128)}', space=vmem, size = 0x12000, scoped, tag = 'internal scratch']
  %s0 = inlined_call_operand.hbm [shape: f32[8,128], index: 0, kind: input, shape index: {}]
  %s1 = inlined_call_operand.hbm [shape: bf16[128,128], index: 1, kind: input, shape index: {}]
  %s2 = inlined_call_operand.vmem [shape: f32[1,128], index: 2, kind: input, shape index: {}]
  %s3 = inlined_call_operand.hbm [shape: bf16[128,128], index: 3, kind: input, shape index: {}]
  %s4 = inlined_call_operand.vmem [shape: f32[1,128], index: 4, kind: input, shape index: {}]
  %s5 = inlined_call_operand.hbm [shape: bf16[128,128], index: 5, kind: input, shape index: {}]
  %s6 = inlined_call_operand.vmem [shape: f32[1,128], index: 6, kind: input, shape index: {}]
  %s7 = inlined_call_operand.hbm [shape: bf16[128,128], index: 7, kind: input, shape index: {}]
  %s8 = inlined_call_operand.vmem [shape: f32[1,128], index: 8, kind: input, shape index: {}]
  %s9 = inlined_call_operand.vmem [shape: f32[8,128], index: 9, kind: output, shape index: {}]
  %s10 = sld [smem:[#allocation0]]
  $region66: #{_saplma_forward_impl.1} parent=0
    _
  %s12 = ssub.s32 1, %s10
  %s13 = scalar_select 0, %s12, %s10
  $region1: #{_saplma_forward_impl.1} parent=0
    #allocation2 [shape = 'u8[4096]{0}', space=vmem, size = 0x1000, scoped, tag = 'input window, operand 0, single buffered']
    #allocation3 [shape = 's32[1]{0}', space=sflag, size = 0x4, scoped, tag = 'scoped memory for _saplma_forward_impl.1']
    #allocation4 [shape = 'u8[32768]{0}', space=vmem, size = 0x8000, scoped, tag = 'input window, operand 1, single buffered']
    #allocation5 [shape = 's32[1]{0}', space=sflag, size = 0x4, scoped, tag = 'scoped memory for _saplma_forward_impl.1']
    #allocation6 [shape = 'u8[32768]{0}', space=vmem, size = 0x8000, scoped, tag = 'input window, operand 3, single buffered']
    #allocation7 [shape = 'u8[32768]{0}', space=vmem, size = 0x8000, scoped, tag = 'input window, operand 5, single buffered']
    #allocation8 [shape = 's32[1]{0}', space=sflag, size = 0x4, scoped, tag = 'scoped memory for _saplma_forward_impl.1']
    #allocation9 [shape = 'u8[32768]{0}', space=vmem, size = 0x8000, scoped, tag = 'input window, operand 7, single buffered']
    %14 = vsyncpa [#allocation3], 0
    %15 = vsyncpa [#allocation5], 0
    %16 = vsyncpa [#allocation8], 0
    // Predicated region
    $region2: #{_saplma_forward_impl.1} parent=1 // pred_check
      _
    $region3: #{_saplma_forward_impl.1} parent=1 // pred_check_branch
      %18 = sbr.rel (0) target = $region5
    $region4: #{_saplma_forward_impl.1} parent=1 // pred_region
      %s20 = ssub.s32 128, 128
      %21 = vsyncadd [#allocation3], %s20
      %s23 = sshll.u32 [#allocation2], 4
      %s24 = int_to_ptr.vmem [resolvable:$true] %s23
      %26 = dma.hbm_to_vmem [thread:$0]  %s0, 128, %s24, [#allocation3]
    $region5: #{_saplma_forward_impl.1} parent=1 // pred_fallthru
      _
    // Predicated region
    $region6: #{_saplma_forward_impl.1} parent=1 // pred_check
      _
    $region7: #{_saplma_forward_impl.1} parent=1 // pred_check_branch
      %28 = sbr.rel (0) target = $region9
    $region8: #{_saplma_forward_impl.1} parent=1 // pred_region
      %s30 = ssub.s32 1024, 1024
      %31 = vsyncadd [#allocation5], %s30
      %s32 = sshll.u32 [#allocation4], 4
      %s33 = int_to_ptr.vmem [resolvable:$true] %s32
      %38 = dma.hbm_to_vmem [thread:$0]  %s1, 1024, %s33, [#allocation5], 64, 64, 4
    $region9: #{_saplma_forward_impl.1} parent=1 // pred_fallthru
      _
    // Predicated region
    $region10: #{_saplma_forward_impl.1} parent=1 // pred_check
      _
    $region11: #{_saplma_forward_impl.1} parent=1 // pred_check_branch
      %40 = sbr.rel (0) target = $region13
    $region12: #{_saplma_forward_impl.1} parent=1 // pred_region
      _
    $region13: #{_saplma_forward_impl.1} parent=1 // pred_fallthru
      _
    // Predicated region
    $region14: #{_saplma_forward_impl.1} parent=1 // pred_check
      _
    $region15: #{_saplma_forward_impl.1} parent=1 // pred_check_branch
      %42 = sbr.rel (0) target = $region17
    $region16: #{_saplma_forward_impl.1} parent=1 // pred_region
      %s44 = ssub.s32 1024, 1024
      %45 = vsyncadd [#allocation5], %s44
      %s46 = sshll.u32 [#allocation6], 4
      %s47 = int_to_ptr.vmem [resolvable:$true] %s46
      %52 = dma.hbm_to_vmem [thread:$0]  %s3, 1024, %s47, [#allocation5], 64, 64, 4
    $region17: #{_saplma_forward_impl.1} parent=1 // pred_fallthru
      _
    // Predicated region
    $region18: #{_saplma_forward_impl.1} parent=1 // pred_check
      _
    $region19: #{_saplma_forward_impl.1} parent=1 // pred_check_branch
      %54 = sbr.rel (0) target = $region21
    $region20: #{_saplma_forward_impl.1} parent=1 // pred_region
      _
    $region21: #{_saplma_forward_impl.1} parent=1 // pred_fallthru
      _
    // Predicated region
    $region22: #{_saplma_forward_impl.1} parent=1 // pred_check
      _
    $region23: #{_saplma_forward_impl.1} parent=1 // pred_check_branch
      %56 = sbr.rel (0) target = $region25
    $region24: #{_saplma_forward_impl.1} parent=1 // pred_region
      %s58 = ssub.s32 1024, 1024
      %59 = vsyncadd [#allocation8], %s58
      %s60 = sshll.u32 [#allocation7], 4
      %s61 = int_to_ptr.vmem [resolvable:$true] %s60
      %66 = dma.hbm_to_vmem [thread:$0]  %s5, 1024, %s61, [#allocation8], 64, 64, 4
    $region25: #{_saplma_forward_impl.1} parent=1 // pred_fallthru
      _
    // Predicated region
    $region26: #{_saplma_forward_impl.1} parent=1 // pred_check
      _
    $region27: #{_saplma_forward_impl.1} parent=1 // pred_check_branch
      %68 = sbr.rel (0) target = $region29
    $region28: #{_saplma_forward_impl.1} parent=1 // pred_region
      _
    $region29: #{_saplma_forward_impl.1} parent=1 // pred_fallthru
      _
    // Predicated region
    $region30: #{_saplma_forward_impl.1} parent=1 // pred_check
      _
    $region31: #{_saplma_forward_impl.1} parent=1 // pred_check_branch
      %70 = sbr.rel (0) target = $region33
    $region32: #{_saplma_forward_impl.1} parent=1 // pred_region
      %s72 = ssub.s32 1024, 1024
      %73 = vsyncadd [#allocation8], %s72
      %s74 = sshll.u32 [#allocation9], 4
      %s75 = int_to_ptr.vmem [resolvable:$true] %s74
      %80 = dma.hbm_to_vmem [thread:$0]  %s7, 1024, %s75, [#allocation8], 64, 64, 4
    $region33: #{_saplma_forward_impl.1} parent=1 // pred_fallthru
      _
    // Predicated region
    $region34: #{_saplma_forward_impl.1} parent=1 // pred_check
      _
    $region35: #{_saplma_forward_impl.1} parent=1 // pred_check_branch
      %82 = sbr.rel (0) target = $region37
    $region36: #{_saplma_forward_impl.1} parent=1 // pred_region
      _
    $region37: #{_saplma_forward_impl.1} parent=1 // pred_fallthru
      _
    // Predicated region
    $region38: #{_saplma_forward_impl.1} parent=1 // pred_check
      _
    $region39: #{_saplma_forward_impl.1} parent=1 // pred_check_branch
      %84 = sbr.rel (0) target = $region41
    $region40: #{_saplma_forward_impl.1} parent=1 // pred_region
      %85 = dma.done [#allocation3], 128
    $region41: #{_saplma_forward_impl.1} parent=1 // pred_fallthru
      _
    // Predicated region
    $region42: #{_saplma_forward_impl.1} parent=1 // pred_check
      _
    $region43: #{_saplma_forward_impl.1} parent=1 // pred_check_branch
      %87 = sbr.rel (0) target = $region45
    $region44: #{_saplma_forward_impl.1} parent=1 // pred_region
      %88 = dma.done [#allocation5], 1024
    $region45: #{_saplma_forward_impl.1} parent=1 // pred_fallthru
      _
    // Predicated region
    $region46: #{_saplma_forward_impl.1} parent=1 // pred_check
      _
    $region47: #{_saplma_forward_impl.1} parent=1 // pred_check_branch
      %90 = sbr.rel (0) target = $region49
    $region48: #{_saplma_forward_impl.1} parent=1 // pred_region
      %91 = dma.done [#allocation5], 1024
    $region49: #{_saplma_forward_impl.1} parent=1 // pred_fallthru
      _
    // Predicated region
    $region50: #{_saplma_forward_impl.1} parent=1 // pred_check
      _
    $region51: #{_saplma_forward_impl.1} parent=1 // pred_check_branch
      %93 = sbr.rel (0) target = $region53
    $region52: #{_saplma_forward_impl.1} parent=1 // pred_region
      %94 = dma.done [#allocation8], 1024
    $region53: #{_saplma_forward_impl.1} parent=1 // pred_fallthru
      _
    // Predicated region
    $region54: #{_saplma_forward_impl.1} parent=1 // pred_check
      _
    $region55: #{_saplma_forward_impl.1} parent=1 // pred_check_branch
      %96 = sbr.rel (0) target = $region57
    $region56: #{_saplma_forward_impl.1} parent=1 // pred_region
      %97 = dma.done [#allocation8], 1024
    $region57: #{_saplma_forward_impl.1} parent=1 // pred_fallthru
      _
    %v99 = vld [vmem:[#allocation2] sm:$0xff]
    %v100 = vpack.c.bf16 %v99, %v99
    %v101 = vld [vmem:[#allocation4] sm:$0xf]
    %v102 = vld [vmem:[#allocation4 + $0x4] sm:$0xf]
    %v103 = vld [vmem:[#allocation4 + $0x8] sm:$0xf]
    %v104 = vld [vmem:[#allocation4 + $0xc] sm:$0xf]
    %v105 = vld [vmem:[#allocation4 + $0x10] sm:$0xf]
    %v106 = vld [vmem:[#allocation4 + $0x14] sm:$0xf]
    %v107 = vld [vmem:[#allocation4 + $0x18] sm:$0xf]
    %v108 = vld [vmem:[#allocation4 + $0x1c] sm:$0xf]
    %v109 = vld [vmem:[#allocation4 + $0x20] sm:$0xf]
    %v110 = vld [vmem:[#allocation4 + $0x24] sm:$0xf]
    %v111 = vld [vmem:[#allocation4 + $0x28] sm:$0xf]
    %v112 = vld [vmem:[#allocation4 + $0x2c] sm:$0xf]
    %v113 = vld [vmem:[#allocation4 + $0x30] sm:$0xf]
    %v114 = vld [vmem:[#allocation4 + $0x34] sm:$0xf]
    %v115 = vld [vmem:[#allocation4 + $0x38] sm:$0xf]
    %v116 = vld [vmem:[#allocation4 + $0x3c] sm:$0xf]
    %v117 = vld [vmem:[%s2] sm:$0x1]
    %v119 = vlaneseq
    %v120 = vshrl.u32 %v119, 7
    %v121 = vsub.s32 0, %v120
    %v122 = vrot.slane %v117, %v121
    %v140 = vunpack.c.l.b16 %v101
    %v141 = vunpack.c.l.b16 %v102
    %v142 = vunpack.c.l.b16 %v103
    %v143 = vunpack.c.l.b16 %v104
    %v144 = vunpack.c.l.b16 %v105
    %v145 = vunpack.c.l.b16 %v106
    %v146 = vunpack.c.l.b16 %v107
    %v147 = vunpack.c.l.b16 %v108
    %v148 = vunpack.c.l.b16 %v109
    %v149 = vunpack.c.l.b16 %v110
    %v150 = vunpack.c.l.b16 %v111
    %v151 = vunpack.c.l.b16 %v112
    %v152 = vunpack.c.l.b16 %v113
    %v153 = vunpack.c.l.b16 %v114
    %v154 = vunpack.c.l.b16 %v115
    %v155 = vunpack.c.l.b16 %v116
    %v156 = vpack.c.b16 %v141, %v140
    %v157 = vpack.c.b16 %v143, %v142
    %v158 = vpack.c.b16 %v145, %v144
    %v159 = vpack.c.b16 %v147, %v146
    %v160 = vpack.c.b16 %v149, %v148
    %v161 = vpack.c.b16 %v151, %v150
    %v162 = vpack.c.b16 %v153, %v152
    %v163 = vpack.c.b16 %v155, %v154
    %172 = vmatprep.subr.bf16.mxu0 0
    %173 = vmatpush1.bf16.msra.mxu0 %v156
    %174 = vmatprep.subr.bf16.mxu0 0
    %175 = vmatpush1.bf16.msra.mxu0 %v157
    %176 = vmatprep.subr.bf16.mxu0 0
    %177 = vmatpush1.bf16.msra.mxu0 %v158
    %178 = vmatprep.subr.bf16.mxu0 0
    %179 = vmatpush1.bf16.msra.mxu0 %v159
    %180 = vmatprep.subr.bf16.mxu0 0
    %181 = vmatpush1.bf16.msra.mxu0 %v160
    %182 = vmatprep.subr.bf16.mxu0 0
    %183 = vmatpush1.bf16.msra.mxu0 %v161
    %184 = vmatprep.subr.bf16.mxu0 0
    %185 = vmatpush1.bf16.msra.mxu0 %v162
    %186 = vmatprep.subr.bf16.mxu0 0
    %187 = vmatpush1.bf16.msra.mxu0 %v163
    %188 = vmatprep.subr.bf16.mxu0 0
    %189 = vmatpush1.bf16.msra.mxu0 0
    %190 = vmatprep.subr.bf16.mxu0 0
    %191 = vmatpush1.bf16.msra.mxu0 0
    %192 = vmatprep.subr.bf16.mxu0 0
    %193 = vmatpush1.bf16.msra.mxu0 0
    %194 = vmatprep.subr.bf16.mxu0 0
    %195 = vmatpush1.bf16.msra.mxu0 0
    %196 = vmatprep.subr.bf16.mxu0 0
    %197 = vmatpush1.bf16.msra.mxu0 0
    %198 = vmatprep.subr.bf16.mxu0 0
    %199 = vmatpush1.bf16.msra.mxu0 0
    %200 = vmatprep.subr.bf16.mxu0 0
    %201 = vmatpush1.bf16.msra.mxu0 0
    %202 = vmatprep.subr.bf16.mxu0 0
    %203 = vmatpush1.bf16.msra.mxu0 0
    %204 = vmatprep.mubr.bf16.mxu0 0
    %205 = vmatmul.mubr.bf16.gmra.mrb[0].mxu0 %v100
    %v206 = vpop.f32.mrb[0].mxu0
    %v207 = vadd.f32 %v122, %v206
    %v208 = vpop.f32.mrb[0].mxu0
    %v209 = vpop.f32.mrb[0].mxu0
    %v210 = vpop.f32.mrb[0].mxu0
    %211 = vdwg.mxu0
    %v212 = vmax.f32 %v207, 0.0
    %v213 = vpack.c.bf16 %v212, %v212
    %v214 = vld [vmem:[#allocation6] sm:$0xf]
    %v215 = vld [vmem:[#allocation6 + $0x4] sm:$0xf]
    %v216 = vld [vmem:[#allocation6 + $0x8] sm:$0xf]
    %v217 = vld [vmem:[#allocation6 + $0xc] sm:$0xf]
    %v218 = vld [vmem:[#allocation6 + $0x10] sm:$0xf]
    %v219 = vld [vmem:[#allocation6 + $0x14] sm:$0xf]
    %v220 = vld [vmem:[#allocation6 + $0x18] sm:$0xf]
    %v221 = vld [vmem:[#allocation6 + $0x1c] sm:$0xf]
    %v222 = vld [vmem:[#allocation6 + $0x20] sm:$0xf]
    %v223 = vld [vmem:[#allocation6 + $0x24] sm:$0xf]
    %v224 = vld [vmem:[#allocation6 + $0x28] sm:$0xf]
    %v225 = vld [vmem:[#allocation6 + $0x2c] sm:$0xf]
    %v226 = vld [vmem:[#allocation6 + $0x30] sm:$0xf]
    %v227 = vld [vmem:[#allocation6 + $0x34] sm:$0xf]
    %v228 = vld [vmem:[#allocation6 + $0x38] sm:$0xf]
    %v229 = vld [vmem:[#allocation6 + $0x3c] sm:$0xf]
    %v230 = vld [vmem:[%s4] sm:$0x1]
    %v232 = vlaneseq
    %v233 = vshrl.u32 %v232, 7
    %v234 = vsub.s32 0, %v233
    %v235 = vrot.slane %v230, %v234
    %v253 = vunpack.c.l.b16 %v214
    %v254 = vunpack.c.l.b16 %v215
    %v255 = vunpack.c.l.b16 %v216
    %v256 = vunpack.c.l.b16 %v217
    %v257 = vunpack.c.l.b16 %v218
    %v258 = vunpack.c.l.b16 %v219
    %v259 = vunpack.c.l.b16 %v220
    %v260 = vunpack.c.l.b16 %v221
    %v261 = vunpack.c.l.b16 %v222
    %v262 = vunpack.c.l.b16 %v223
    %v263 = vunpack.c.l.b16 %v224
    %v264 = vunpack.c.l.b16 %v225
    %v265 = vunpack.c.l.b16 %v226
    %v266 = vunpack.c.l.b16 %v227
    %v267 = vunpack.c.l.b16 %v228
    %v268 = vunpack.c.l.b16 %v229
    %v269 = vpack.c.b16 %v254, %v253
    %v270 = vpack.c.b16 %v256, %v255
    %v271 = vpack.c.b16 %v258, %v257
    %v272 = vpack.c.b16 %v260, %v259
    %v273 = vpack.c.b16 %v262, %v261
    %v274 = vpack.c.b16 %v264, %v263
    %v275 = vpack.c.b16 %v266, %v265
    %v276 = vpack.c.b16 %v268, %v267
    %285 = vmatprep.subr.bf16.mxu0 0
    %286 = vmatpush1.bf16.msra.mxu0 %v269
    %287 = vmatprep.subr.bf16.mxu0 0
    %288 = vmatpush1.bf16.msra.mxu0 %v270
    %289 = vmatprep.subr.bf16.mxu0 0
    %290 = vmatpush1.bf16.msra.mxu0 %v271
    %291 = vmatprep.subr.bf16.mxu0 0
    %292 = vmatpush1.bf16.msra.mxu0 %v272
    %293 = vmatprep.subr.bf16.mxu0 0
    %294 = vmatpush1.bf16.msra.mxu0 %v273
    %295 = vmatprep.subr.bf16.mxu0 0
    %296 = vmatpush1.bf16.msra.mxu0 %v274
    %297 = vmatprep.subr.bf16.mxu0 0
    %298 = vmatpush1.bf16.msra.mxu0 %v275
    %299 = vmatprep.subr.bf16.mxu0 0
    %300 = vmatpush1.bf16.msra.mxu0 %v276
    %301 = vmatprep.subr.bf16.mxu0 0
    %302 = vmatpush1.bf16.msra.mxu0 0
    %303 = vmatprep.subr.bf16.mxu0 0
    %304 = vmatpush1.bf16.msra.mxu0 0
    %305 = vmatprep.subr.bf16.mxu0 0
    %306 = vmatpush1.bf16.msra.mxu0 0
    %307 = vmatprep.subr.bf16.mxu0 0
    %308 = vmatpush1.bf16.msra.mxu0 0
    %309 = vmatprep.subr.bf16.mxu0 0
    %310 = vmatpush1.bf16.msra.mxu0 0
    %311 = vmatprep.subr.bf16.mxu0 0
    %312 = vmatpush1.bf16.msra.mxu0 0
    %313 = vmatprep.subr.bf16.mxu0 0
    %314 = vmatpush1.bf16.msra.mxu0 0
    %315 = vmatprep.subr.bf16.mxu0 0
    %316 = vmatpush1.bf16.msra.mxu0 0
    %317 = vmatprep.mubr.bf16.mxu0 0
    %318 = vmatmul.mubr.bf16.gmra.mrb[0].mxu0 %v213
    %v319 = vpop.f32.mrb[0].mxu0
    %v320 = vadd.f32 %v235, %v319
    %v321 = vpop.f32.mrb[0].mxu0
    %v322 = vpop.f32.mrb[0].mxu0
    %v323 = vpop.f32.mrb[0].mxu0
    %324 = vdwg.mxu0
    %v325 = vmax.f32 %v320, 0.0
    %v326 = vpack.c.bf16 %v325, %v325
    %v327 = vld [vmem:[#allocation7] sm:$0xf]
    %v328 = vld [vmem:[#allocation7 + $0x4] sm:$0xf]
    %v329 = vld [vmem:[#allocation7 + $0x8] sm:$0xf]
    %v330 = vld [vmem:[#allocation7 + $0xc] sm:$0xf]
    %v331 = vld [vmem:[#allocation7 + $0x10] sm:$0xf]
    %v332 = vld [vmem:[#allocation7 + $0x14] sm:$0xf]
    %v333 = vld [vmem:[#allocation7 + $0x18] sm:$0xf]
    %v334 = vld [vmem:[#allocation7 + $0x1c] sm:$0xf]
    %v335 = vld [vmem:[#allocation7 + $0x20] sm:$0xf]
    %v336 = vld [vmem:[#allocation7 + $0x24] sm:$0xf]
    %v337 = vld [vmem:[#allocation7 + $0x28] sm:$0xf]
    %v338 = vld [vmem:[#allocation7 + $0x2c] sm:$0xf]
    %v339 = vld [vmem:[#allocation7 + $0x30] sm:$0xf]
    %v340 = vld [vmem:[#allocation7 + $0x34] sm:$0xf]
    %v341 = vld [vmem:[#allocation7 + $0x38] sm:$0xf]
    %v342 = vld [vmem:[#allocation7 + $0x3c] sm:$0xf]
    %v343 = vld [vmem:[%s6] sm:$0x1]
    %v345 = vlaneseq
    %v346 = vshrl.u32 %v345, 7
    %v347 = vsub.s32 0, %v346
    %v348 = vrot.slane %v343, %v347
    %v366 = vunpack.c.l.b16 %v327
    %v367 = vunpack.c.l.b16 %v328
    %v368 = vunpack.c.l.b16 %v329
    %v369 = vunpack.c.l.b16 %v330
    %v370 = vunpack.c.l.b16 %v331
    %v371 = vunpack.c.l.b16 %v332
    %v372 = vunpack.c.l.b16 %v333
    %v373 = vunpack.c.l.b16 %v334
    %v374 = vunpack.c.l.b16 %v335
    %v375 = vunpack.c.l.b16 %v336
    %v376 = vunpack.c.l.b16 %v337
    %v377 = vunpack.c.l.b16 %v338
    %v378 = vunpack.c.l.b16 %v339
    %v379 = vunpack.c.l.b16 %v340
    %v380 = vunpack.c.l.b16 %v341
    %v381 = vunpack.c.l.b16 %v342
    %v382 = vpack.c.b16 %v367, %v366
    %v383 = vpack.c.b16 %v369, %v368
    %v384 = vpack.c.b16 %v371, %v370
    %v385 = vpack.c.b16 %v373, %v372
    %v386 = vpack.c.b16 %v375, %v374
    %v387 = vpack.c.b16 %v377, %v376
    %v388 = vpack.c.b16 %v379, %v378
    %v389 = vpack.c.b16 %v381, %v380
    %398 = vmatprep.subr.bf16.mxu0 0
    %399 = vmatpush1.bf16.msra.mxu0 %v382
    %400 = vmatprep.subr.bf16.mxu0 0
    %401 = vmatpush1.bf16.msra.mxu0 %v383
    %402 = vmatprep.subr.bf16.mxu0 0
    %403 = vmatpush1.bf16.msra.mxu0 %v384
    %404 = vmatprep.subr.bf16.mxu0 0
    %405 = vmatpush1.bf16.msra.mxu0 %v385
    %406 = vmatprep.subr.bf16.mxu0 0
    %407 = vmatpush1.bf16.msra.mxu0 %v386
    %408 = vmatprep.subr.bf16.mxu0 0
    %409 = vmatpush1.bf16.msra.mxu0 %v387
    %410 = vmatprep.subr.bf16.mxu0 0
    %411 = vmatpush1.bf16.msra.mxu0 %v388
    %412 = vmatprep.subr.bf16.mxu0 0
    %413 = vmatpush1.bf16.msra.mxu0 %v389
    %414 = vmatprep.subr.bf16.mxu0 0
    %415 = vmatpush1.bf16.msra.mxu0 0
    %416 = vmatprep.subr.bf16.mxu0 0
    %417 = vmatpush1.bf16.msra.mxu0 0
    %418 = vmatprep.subr.bf16.mxu0 0
    %419 = vmatpush1.bf16.msra.mxu0 0
    %420 = vmatprep.subr.bf16.mxu0 0
    %421 = vmatpush1.bf16.msra.mxu0 0
    %422 = vmatprep.subr.bf16.mxu0 0
    %423 = vmatpush1.bf16.msra.mxu0 0
    %424 = vmatprep.subr.bf16.mxu0 0
    %425 = vmatpush1.bf16.msra.mxu0 0
    %426 = vmatprep.subr.bf16.mxu0 0
    %427 = vmatpush1.bf16.msra.mxu0 0
    %428 = vmatprep.subr.bf16.mxu0 0
    %429 = vmatpush1.bf16.msra.mxu0 0
    %430 = vmatprep.mubr.bf16.mxu0 0
    %431 = vmatmul.mubr.bf16.gmra.mrb[0].mxu0 %v326
    %v432 = vpop.f32.mrb[0].mxu0
    %v433 = vadd.f32 %v348, %v432
    %v434 = vpop.f32.mrb[0].mxu0
    %v435 = vpop.f32.mrb[0].mxu0
    %v436 = vpop.f32.mrb[0].mxu0
    %437 = vdwg.mxu0
    %v438 = vmax.f32 %v433, 0.0
    %v439 = vpack.c.bf16 %v438, %v438
    %v440 = vld [vmem:[#allocation9] sm:$0xf]
    %v441 = vld [vmem:[#allocation9 + $0x4] sm:$0xf]
    %v442 = vld [vmem:[#allocation9 + $0x8] sm:$0xf]
    %v443 = vld [vmem:[#allocation9 + $0xc] sm:$0xf]
    %v444 = vld [vmem:[#allocation9 + $0x10] sm:$0xf]
    %v445 = vld [vmem:[#allocation9 + $0x14] sm:$0xf]
    %v446 = vld [vmem:[#allocation9 + $0x18] sm:$0xf]
    %v447 = vld [vmem:[#allocation9 + $0x1c] sm:$0xf]
    %v448 = vld [vmem:[#allocation9 + $0x20] sm:$0xf]
    %v449 = vld [vmem:[#allocation9 + $0x24] sm:$0xf]
    %v450 = vld [vmem:[#allocation9 + $0x28] sm:$0xf]
    %v451 = vld [vmem:[#allocation9 + $0x2c] sm:$0xf]
    %v452 = vld [vmem:[#allocation9 + $0x30] sm:$0xf]
    %v453 = vld [vmem:[#allocation9 + $0x34] sm:$0xf]
    %v454 = vld [vmem:[#allocation9 + $0x38] sm:$0xf]
    %v455 = vld [vmem:[#allocation9 + $0x3c] sm:$0xf]
    %v456 = vld [vmem:[%s8] sm:$0x1]
    %v458 = vlaneseq
    %v459 = vshrl.u32 %v458, 7
    %v460 = vsub.s32 0, %v459
    %v461 = vrot.slane %v456, %v460
    %v479 = vunpack.c.l.b16 %v440
    %v480 = vunpack.c.l.b16 %v441
    %v481 = vunpack.c.l.b16 %v442
    %v482 = vunpack.c.l.b16 %v443
    %v483 = vunpack.c.l.b16 %v444
    %v484 = vunpack.c.l.b16 %v445
    %v485 = vunpack.c.l.b16 %v446
    %v486 = vunpack.c.l.b16 %v447
    %v487 = vunpack.c.l.b16 %v448
    %v488 = vunpack.c.l.b16 %v449
    %v489 = vunpack.c.l.b16 %v450
    %v490 = vunpack.c.l.b16 %v451
    %v491 = vunpack.c.l.b16 %v452
    %v492 = vunpack.c.l.b16 %v453
    %v493 = vunpack.c.l.b16 %v454
    %v494 = vunpack.c.l.b16 %v455
    %v495 = vpack.c.b16 %v480, %v479
    %v496 = vpack.c.b16 %v482, %v481
    %v497 = vpack.c.b16 %v484, %v483
    %v498 = vpack.c.b16 %v486, %v485
    %v499 = vpack.c.b16 %v488, %v487
    %v500 = vpack.c.b16 %v490, %v489
    %v501 = vpack.c.b16 %v492, %v491
    %v502 = vpack.c.b16 %v494, %v493
    %511 = vmatprep.subr.bf16.mxu0 0
    %512 = vmatpush1.bf16.msra.mxu0 %v495
    %513 = vmatprep.subr.bf16.mxu0 0
    %514 = vmatpush1.bf16.msra.mxu0 %v496
    %515 = vmatprep.subr.bf16.mxu0 0
    %516 = vmatpush1.bf16.msra.mxu0 %v497
    %517 = vmatprep.subr.bf16.mxu0 0
    %518 = vmatpush1.bf16.msra.mxu0 %v498
    %519 = vmatprep.subr.bf16.mxu0 0
    %520 = vmatpush1.bf16.msra.mxu0 %v499
    %521 = vmatprep.subr.bf16.mxu0 0
    %522 = vmatpush1.bf16.msra.mxu0 %v500
    %523 = vmatprep.subr.bf16.mxu0 0
    %524 = vmatpush1.bf16.msra.mxu0 %v501
    %525 = vmatprep.subr.bf16.mxu0 0
    %526 = vmatpush1.bf16.msra.mxu0 %v502
    %527 = vmatprep.subr.bf16.mxu0 0
    %528 = vmatpush1.bf16.msra.mxu0 0
    %529 = vmatprep.subr.bf16.mxu0 0
    %530 = vmatpush1.bf16.msra.mxu0 0
    %531 = vmatprep.subr.bf16.mxu0 0
    %532 = vmatpush1.bf16.msra.mxu0 0
    %533 = vmatprep.subr.bf16.mxu0 0
    %534 = vmatpush1.bf16.msra.mxu0 0
    %535 = vmatprep.subr.bf16.mxu0 0
    %536 = vmatpush1.bf16.msra.mxu0 0
    %537 = vmatprep.subr.bf16.mxu0 0
    %538 = vmatpush1.bf16.msra.mxu0 0
    %539 = vmatprep.subr.bf16.mxu0 0
    %540 = vmatpush1.bf16.msra.mxu0 0
    %541 = vmatprep.subr.bf16.mxu0 0
    %542 = vmatpush1.bf16.msra.mxu0 0
    %543 = vmatprep.mubr.bf16.mxu0 0
    %544 = vmatmul.mubr.bf16.gmra.mrb[0].mxu0 %v439
    %v545 = vpop.f32.mrb[0].mxu0
    %v546 = vadd.f32 %v461, %v545
    %v547 = vpop.f32.mrb[0].mxu0
    %v548 = vpop.f32.mrb[0].mxu0
    %v549 = vpop.f32.mrb[0].mxu0
    %550 = vdwg.mxu0
    %551 = vst [vmem:[%s9] sm:$0xff] %v546
    // Predicated region
    $region58: #{_saplma_forward_impl.1} parent=1 // pred_check
      _
    $region59: #{_saplma_forward_impl.1} parent=1 // pred_check_branch
      %553 = sbr.rel (0) target = $region61
    $region60: #{_saplma_forward_impl.1} parent=1 // pred_region
      _
    $region61: #{_saplma_forward_impl.1} parent=1 // pred_fallthru
      _
    // Predicated region
    $region62: #{_saplma_forward_impl.1} parent=1 // pred_check
      _
    $region63: #{_saplma_forward_impl.1} parent=1 // pred_check_branch
      %555 = sbr.rel (0) target = $region65
    $region64: #{_saplma_forward_impl.1} parent=1 // pred_region
      _
    $region65: #{_saplma_forward_impl.1} parent=1 // pred_fallthru
      _
    %556 = vsyncpa [#allocation3], 1
    %557 = vsyncpa [#allocation5], 1
    %558 = vsyncpa [#allocation8], 1

</llo_original>
